<compile_context>
chip_gen: v7x
topology: tpu7x:2x2x1
jax: 0.10.0
libtpu: 0.0.40
codegen_flags: <defaults>
</compile_context>

<pallas_src>
import jax
import jax.numpy as jnp
from jax.experimental import pallas as pl
from jax.experimental.pallas import tpu as pltpu


def _level1_2_kernel(x_ref, o_ref):
    """Elementwise (x**3 + 1) * 0.2 on one VMEM tile.

    I/O in the input's native dtype; cube + affine computed in f32 in-register
    on the VPU (cast is free under the DMA).
    """
    x = x_ref[...].astype(jnp.float32)
    y = (x * x * x + 1.0) * 0.2          # * 0.2 instead of / 5: single vmul
    o_ref[...] = y.astype(o_ref.dtype)


def _choose_layout(n, itemsize):
    """Pick a lane-dense 2-D layout (nrows, ncols) + row tiling for n elems."""
    # Largest lane-dense trailing dim (multiple of 128) that divides n, so no
    # wrapper-side pad/unpad HBM passes are needed for typical shapes.
    ncols = None
    for c in (1024, 512, 256, 128):
        if n >= c and n % c == 0:
            ncols = c
            break
    pad = 0
    if ncols is None:                     # ragged fallback: minimal pad to 128
        ncols = 128
        pad = (-n) % ncols
    nrows = (n + pad) // ncols

    # ~8 MiB per tile buffer: large enough to amortize the per-grid-step
    # pipeline overhead on every generation, small enough that the
    # double-buffered in+out working set (4x tile) fits comfortably in VMEM.
    gran = 16 if itemsize < 4 else 8      # sublane packing for 16-bit dtypes
    target_rows = max(gran, (8 * 1024 * 1024) // (ncols * itemsize))
    target_rows = (target_rows // gran) * gran

    if nrows <= target_rows:
        if nrows >= 2 * gran:
            # Split into >= 2 grid steps so "parallel" can use both v7x cores.
            block_rows = max(gran, (pl.cdiv(nrows, 2) // gran) * gran)
        else:
            block_rows = nrows            # single full-extent block (ok < 8)
    else:
        block_rows = target_rows
    return ncols, nrows, pad, block_rows


@jax.jit
def level1_2(x):
    """Elementwise (x**3 + 1) / 5, matching Level1_2.forward."""
    # TODO(synk): integer input dtypes would round-trip through f32; the
    # reference module is float-only, so only float dtypes are supported here.
    orig_shape = x.shape
    n = x.size
    itemsize = jnp.dtype(x.dtype).itemsize
    ncols, nrows, pad, block_rows = _choose_layout(n, itemsize)

    x_flat = x.reshape(-1)                # bitcast under jit (contiguous)
    if pad:                               # rare ragged fallback only
        x_flat = jnp.pad(x_flat, (0, pad))
    x2d = x_flat.reshape(nrows, ncols)

    grid = (pl.cdiv(nrows, block_rows),)  # Pallas masks the ragged last block
    out2d = pl.pallas_call(
        _level1_2_kernel,
        out_shape=jax.ShapeDtypeStruct((nrows, ncols), x.dtype),
        grid=grid,
        in_specs=[pl.BlockSpec((block_rows, ncols), lambda i: (i, 0))],
        out_specs=pl.BlockSpec((block_rows, ncols), lambda i: (i, 0)),
        compiler_params=pltpu.CompilerParams(
            dimension_semantics=("parallel",),
            vmem_limit_bytes=48 * 1024 * 1024,
        ),
        cost_estimate=pl.CostEstimate(
            flops=3 * n, transcendentals=0, bytes_accessed=2 * n * itemsize),
    )(x2d)

    out_flat = out2d.reshape(-1)
    if pad:
        out_flat = out_flat[:n]
    return out_flat.reshape(orig_shape)


def _reference(x):
    """Pure-JAX reference matching the PyTorch module."""
    return (x ** 3 + jnp.ones(x.shape, x.dtype)) / 5.0


if __name__ == "__main__":
    key = jax.random.PRNGKey(0)
    # Small deterministic shape; the module is shape-agnostic elementwise.
    x = jax.random.normal(key, (2, 4, 16, 16), dtype=jnp.float32)

    out = level1_2(x)
    out = jax.block_until_ready(out)

    ref = _reference(x)
    assert out.shape == x.shape
    assert out.dtype == x.dtype
    assert bool(jnp.allclose(out, ref, atol=1e-6, rtol=1e-6))

    print("KERNEL_OK")
</pallas_src>

<mosaic_0001>
module attributes {stable_mosaic.version = 11 : i64} {
  func.func @_level1_2_kernel(%arg0: i32, %arg1: memref<2x1024xf32, #tpu.memory_space<vmem>>, %arg2: memref<2x1024xf32, #tpu.memory_space<vmem>>) attributes {dimension_semantics = [#tpu.dimension_semantics<parallel>], iteration_bounds = array<i64: 1>, scalar_prefetch = 0 : i64, scratch_operands = 0 : i64, tpu.core_type = #tpu.core_type<tc>, window_params = [{transform_indices = @transform_0, window_bounds = array<i64: 2, 1024>}, {transform_indices = @transform_1, window_bounds = array<i64: 2, 1024>}]} {
    %c0 = arith.constant 0 : index
    %c0_0 = arith.constant 0 : index
    %0 = vector.load %arg1[%c0, %c0_0] : memref<2x1024xf32, #tpu.memory_space<vmem>>, vector<2x1024xf32>
    %1 = arith.mulf %0, %0 : vector<2x1024xf32>
    %2 = arith.mulf %1, %0 : vector<2x1024xf32>
    %cst = arith.constant 1.000000e+00 : f32
    %3 = vector.broadcast %cst : f32 to vector<2x1024xf32>
    %4 = arith.addf %2, %3 : vector<2x1024xf32>
    %cst_1 = arith.constant 2.000000e-01 : f32
    %5 = vector.broadcast %cst_1 : f32 to vector<2x1024xf32>
    %6 = arith.mulf %4, %5 : vector<2x1024xf32>
    %c0_2 = arith.constant 0 : index
    %c0_3 = arith.constant 0 : index
    %7 = vector.load %arg2[%c0_2, %c0_3] : memref<2x1024xf32, #tpu.memory_space<vmem>>, vector<2x1024xf32>
    tpu.vector_store %arg2[%c0_2, %c0_3], %6 {strides = array<i32>} : memref<2x1024xf32, #tpu.memory_space<vmem>>, vector<2x1024xf32>,
    return
  }
  func.func @transform_0(%arg0: i32) -> (i32, i32) {
    %c0_i32 = arith.constant 0 : i32
    %c0_i32_0 = arith.constant 0 : i32
    return %arg0, %c0_i32 : i32, i32
  }
  func.func @transform_1(%arg0: i32) -> (i32, i32) {
    %c0_i32 = arith.constant 0 : i32
    %c0_i32_0 = arith.constant 0 : i32
    return %arg0, %c0_i32 : i32, i32
  }
}

</mosaic_0001>

<llo_original>
// kernel: level1_2.1
$region0: #{level1_2.1}
  #allocation0 [shape = 'u32[]', space=smem, size = 0x4, offset = 0x4, fixed_abs, tag = 'smem constant byte address 0x4 - core index']
  #allocation1 [shape = 'u32[144,128]{1,0:T(1,128)}', space=vmem, size = 0x12000, scoped, tag = 'internal scratch']
  %s0 = inlined_call_operand.vmem [shape: f32[2,1024], index: 0, kind: input, shape index: {}]
  %s1 = inlined_call_operand.vmem [shape: f32[2,1024], index: 1, kind: output, shape index: {}]
  %s2 = sld [smem:[#allocation0]]
  $region14: #{level1_2.1} parent=0
    _
  %s4 = ssub.s32 1, %s2
  %s5 = scalar_select 0, %s4, %s2
  // Predicated region
  $region2: #{level1_2.1} parent=0 // pred_check
    _
  $region3: #{level1_2.1} parent=0 // pred_check_branch
    %7 = sbr.rel (0) target = $region5
  $region4: #{level1_2.1} parent=0 // pred_region
    _
  $region5: #{level1_2.1} parent=0 // pred_fallthru
    _
  %v8 = vld [vmem:[%s0] sm:$0xff]
  %v9 = vld [vmem:[%s0 + $0x8] sm:$0xff]
  %v10 = vmul.f32 %v8, %v8
  %v11 = vmul.f32 %v9, %v9
  %v12 = vmul.f32 %v10, %v8
  %v13 = vmul.f32 %v11, %v9
  %v14 = vadd.f32 %v12, 1.0
  %v15 = vadd.f32 %v13, 1.0
  %v16 = vmul.f32 %v14, 0.2
  %v17 = vmul.f32 %v15, 0.2
  %18 = vst [vmem:[%s1] sm:$0xff] %v16
  %19 = vst [vmem:[%s1 + $0x8] sm:$0xff] %v17
  // Predicated region
  $region6: #{level1_2.1} parent=0 // pred_check
    _
  $region7: #{level1_2.1} parent=0 // pred_check_branch
    %21 = sbr.rel (0) target = $region9
  $region8: #{level1_2.1} parent=0 // pred_region
    _
  $region9: #{level1_2.1} parent=0 // pred_fallthru
    _
  // Predicated region
  $region10: #{level1_2.1} parent=0 // pred_check
    _
  $region11: #{level1_2.1} parent=0 // pred_check_branch
    %23 = sbr.rel (0) target = $region13
  $region12: #{level1_2.1} parent=0 // pred_region
    _
  $region13: #{level1_2.1} parent=0 // pred_fallthru
    _

</llo_original>
